<compile_context>
chip_gen: v7x
topology: tpu7x:2x2x1
jax: 0.10.0
libtpu: 0.0.40
codegen_flags: <defaults>
</compile_context>

<pallas_src>
import jax
import jax.numpy as jnp
from jax.experimental import pallas as pl
from jax.experimental.pallas import tpu as pltpu


def _round_up(x, m):
    return (x + m - 1) // m * m


def nlk_center_intersection_kernel(emb_ref, center_ref, z_ref,
                                   w1_ref, b1_ref, w2_ref, b2_ref, out_ref):
    n, bt, kp = emb_ref.shape          # (N, B_T, K_pad)   bf16
    hp = w1_ref.shape[1]               # H_pad
    dp = w2_ref.shape[1]               # D_pad

    # --- two tall MXU matmuls: flatten (N, B_T) -> M = N*B_T ------------------
    x = emb_ref[...].reshape(n * bt, kp)                              # bf16
    h = jnp.dot(x, w1_ref[...], preferred_element_type=jnp.float32)   # f32 acc
    h = jnp.maximum(h + b1_ref[...], 0.0)                             # ReLU, f32
    act = jnp.dot(h.astype(jnp.bfloat16), w2_ref[...],
                  preferred_element_type=jnp.float32)
    act = (act + b2_ref[...]).reshape(n, bt, dp)                      # (N,B_T,Dp)

    # --- fused softmax(axis=0) + weighted sum of center ----------------------
    logits = z_ref[...] * act                       # z is (N,B_T,1): lane bcast
    m = jnp.max(logits, axis=0, keepdims=True)      # stable softmax
    e = jnp.exp(logits - m)                         # (N, B_T, Dp) f32
    num = jnp.sum(e * center_ref[...], axis=0)      # (B_T, Dp)
    den = jnp.sum(e, axis=0)                        # (B_T, Dp)
    out_ref[...] = num * pl.reciprocal(den, approx=True)   # divide on the EUP


def nlk_center_intersection(embeddings, z, w1, b1, w2, b2, *, block_b=256):
    """embeddings: (N, B, 2*dim) f32, z: (N, B) f32,
    w1: (2*dim, hidden), b1: (hidden,), w2: (hidden, dim), b2: (dim,)."""
    N, B, two_d = embeddings.shape
    d = two_d // 2
    H = w1.shape[1]
    assert w1.shape == (two_d, H) and w2.shape == (H, d)

    f32, bf16 = jnp.float32, jnp.bfloat16

    # Lane-dense padded feature sizes (multiples of 128).
    K_p = _round_up(two_d, 128)
    H_p = _round_up(H, 128)
    D_p = _round_up(d, 128)

    # Batch tiling: B_T kept modest (<=256) so the double-buffered tile working
    # set stays well inside v7x's 64 MiB VMEM as well as v5e/v6e.
    B_T = min(block_b, _round_up(B, 8))
    n_tiles = pl.cdiv(B, B_T)
    B_pad = n_tiles * B_T

    # --- wrapper-side padding / dtype prep (done once, outside the kernel) ---
    emb_p = jnp.zeros((N, B_pad, K_p), bf16).at[:, :B, :two_d].set(
        embeddings.astype(bf16))
    center_p = jnp.zeros((N, B_pad, D_p), f32).at[:, :B, :d].set(
        embeddings[..., :d].astype(f32))
    z_p = jnp.zeros((N, B_pad, 1), f32).at[:, :B, 0].set(z.astype(f32))

    w1_p = jnp.zeros((K_p, H_p), bf16).at[:two_d, :H].set(w1.astype(bf16))
    b1_p = jnp.zeros((1, H_p), f32).at[0, :H].set(b1.reshape(-1).astype(f32))
    w2_p = jnp.zeros((H_p, D_p), bf16).at[:H, :d].set(w2.astype(bf16))
    b2_p = jnp.zeros((1, D_p), f32).at[0, :d].set(b2.reshape(-1).astype(f32))

    out = pl.pallas_call(
        nlk_center_intersection_kernel,
        out_shape=jax.ShapeDtypeStruct((B_pad, D_p), f32),
        grid_spec=pltpu.PrefetchScalarGridSpec(
            num_scalar_prefetch=0,
            grid=(n_tiles,),
            in_specs=[
                pl.BlockSpec((N, B_T, K_p), lambda i: (0, i, 0)),   # embeddings
                pl.BlockSpec((N, B_T, D_p), lambda i: (0, i, 0)),   # center
                pl.BlockSpec((N, B_T, 1), lambda i: (0, i, 0)),     # z
                pl.BlockSpec((K_p, H_p), lambda i: (0, 0)),         # w1 (resident)
                pl.BlockSpec((1, H_p), lambda i: (0, 0)),           # b1
                pl.BlockSpec((H_p, D_p), lambda i: (0, 0)),         # w2
                pl.BlockSpec((1, D_p), lambda i: (0, 0)),           # b2
            ],
            out_specs=pl.BlockSpec((B_T, D_p), lambda i: (i, 0)),
        ),
        compiler_params=pltpu.CompilerParams(
            dimension_semantics=("parallel",),        # shard B tiles across TCs
            vmem_limit_bytes=48 * 1024 * 1024,        # > default scoped limits,
        ),                                            # < v7x physical 64 MiB
    )(emb_p, center_p, z_p, w1_p, b1_p, w2_p, b2_p)

    return out[:B, :d]


def init_params(key, dim, hidden_dim):
    """Synthetic init matching the PyTorch module's shapes:
    layer1 Linear(2*dim, hidden) xavier_uniform, layer2 Linear(hidden, dim)
    xavier_uniform, biases uniform(-1/sqrt(fan_in), 1/sqrt(fan_in)).
    Weights stored as (in, out)."""
    k1, k2, k3, k4 = jax.random.split(key, 4)
    fan_in1, fan_out1 = 2 * dim, hidden_dim
    fan_in2, fan_out2 = hidden_dim, dim
    bound1 = (6.0 / (fan_in1 + fan_out1)) ** 0.5
    bound2 = (6.0 / (fan_in2 + fan_out2)) ** 0.5
    w1 = jax.random.uniform(k1, (fan_in1, fan_out1), jnp.float32, -bound1, bound1)
    w2 = jax.random.uniform(k2, (fan_in2, fan_out2), jnp.float32, -bound2, bound2)
    bb1 = 1.0 / (fan_in1 ** 0.5)
    bb2 = 1.0 / (fan_in2 ** 0.5)
    b1 = jax.random.uniform(k3, (fan_out1,), jnp.float32, -bb1, bb1)
    b2 = jax.random.uniform(k4, (fan_out2,), jnp.float32, -bb2, bb2)
    return w1, b1, w2, b2


def reference_forward(embeddings, z, w1, b1, w2, b2):
    d = embeddings.shape[-1] // 2
    center = embeddings[..., :d]
    h = jnp.maximum(jnp.einsum('nbk,kh->nbh', embeddings, w1) + b1, 0.0)
    act = jnp.einsum('nbh,hd->nbd', h, w2) + b2
    attn = jax.nn.softmax(z[..., None] * act, axis=0)
    return jnp.sum(attn * center, axis=0)


if __name__ == "__main__":
    key = jax.random.PRNGKey(0)
    dim, hidden_dim = 32, 64
    N, B = 4, 8                      # N intersected sets, batch B

    k_emb, k_z, k_params = jax.random.split(key, 3)
    embeddings = jax.random.normal(k_emb, (N, B, 2 * dim), jnp.float32)
    z = jax.random.normal(k_z, (N, B), jnp.float32)
    w1, b1, w2, b2 = init_params(k_params, dim, hidden_dim)

    out = nlk_center_intersection(embeddings, z, w1, b1, w2, b2)
    out = jax.block_until_ready(out)
    assert out.shape == (B, dim)

    # Tight check vs a bf16-input-matched f32 reference (same arithmetic as the
    # kernel's bf16-MXU / f32-accumulate path, modulo reduction order + vrcp).
    bcast = lambda a: a.astype(jnp.bfloat16).astype(jnp.float32)
    ref_bf16 = reference_forward(bcast(embeddings), z, bcast(w1), b1, bcast(w2), b2)
    assert jnp.allclose(out, ref_bf16, atol=1e-2, rtol=1e-2), "mismatch vs bf16-matched ref"

    # Looser check vs the pure-f32 reference (bf16 MXU inputs round the operands).
    ref_f32 = reference_forward(embeddings, z, w1, b1, w2, b2)
    assert jnp.allclose(out, ref_f32, atol=5e-2, rtol=5e-2), "mismatch vs f32 ref"

    print("KERNEL_OK")
</pallas_src>

<mosaic_0001>
module attributes {stable_mosaic.version = 11 : i64} {
  func.func @nlk_center_intersection_kernel(%arg0: i32, %arg1: memref<4x8x128xbf16, #tpu.memory_space<vmem>>, %arg2: memref<4x8x128xf32, #tpu.memory_space<vmem>>, %arg3: memref<4x8x1xf32, #tpu.memory_space<vmem>>, %arg4: memref<128x128xbf16, #tpu.memory_space<vmem>>, %arg5: memref<1x128xf32, #tpu.memory_space<vmem>>, %arg6: memref<128x128xbf16, #tpu.memory_space<vmem>>, %arg7: memref<1x128xf32, #tpu.memory_space<vmem>>, %arg8: memref<8x128xf32, #tpu.memory_space<vmem>>) attributes {dimension_semantics = [#tpu.dimension_semantics<parallel>], iteration_bounds = array<i64: 1>, scalar_prefetch = 0 : i64, scratch_operands = 0 : i64, tpu.core_type = #tpu.core_type<tc>, window_params = [{transform_indices = @transform_0, window_bounds = array<i64: 4, 8, 128>}, {transform_indices = @transform_1, window_bounds = array<i64: 4, 8, 128>}, {transform_indices = @transform_2, window_bounds = array<i64: 4, 8, 1>}, {pipeline_mode = #tpu.pipeline_mode<synchronous>, transform_indices = @transform_3, window_bounds = array<i64: 128, 128>}, {pipeline_mode = #tpu.pipeline_mode<synchronous>, transform_indices = @transform_4, window_bounds = array<i64: 1, 128>}, {pipeline_mode = #tpu.pipeline_mode<synchronous>, transform_indices = @transform_5, window_bounds = array<i64: 128, 128>}, {pipeline_mode = #tpu.pipeline_mode<synchronous>, transform_indices = @transform_6, window_bounds = array<i64: 1, 128>}, {transform_indices = @transform_7, window_bounds = array<i64: 8, 128>}]} {
    %c0 = arith.constant 0 : index
    %c0_0 = arith.constant 0 : index
    %c0_1 = arith.constant 0 : index
    %0 = vector.load %arg1[%c0, %c0_0, %c0_1] : memref<4x8x128xbf16, #tpu.memory_space<vmem>>, vector<4x8x128xbf16>
    %1 = vector.shape_cast %0 : vector<4x8x128xbf16> to vector<32x128xbf16>
    %c0_2 = arith.constant 0 : index
    %c0_3 = arith.constant 0 : index
    %2 = vector.load %arg4[%c0_2, %c0_3] : memref<128x128xbf16, #tpu.memory_space<vmem>>, vector<128x128xbf16>
    %cst = arith.constant dense<0.000000e+00> : vector<32x128xf32>
    %3 = tpu.matmul %1, %2, %cst {dimension_numbers = #tpu.dot_dimension_numbers<[1], [0], [0], [1], [0, 0, 1, 1], [], []>} : vector<32x128xbf16>, vector<128x128xbf16>, vector<32x128xf32> -> vector<32x128xf32>
    %c0_4 = arith.constant 0 : index
    %c0_5 = arith.constant 0 : index
    %4 = vector.load %arg5[%c0_4, %c0_5] : memref<1x128xf32, #tpu.memory_space<vmem>>, vector<1x128xf32>
    %5 = vector.broadcast %4 : vector<1x128xf32> to vector<32x128xf32>
    %6 = arith.addf %3, %5 : vector<32x128xf32>
    %cst_6 = arith.constant 0.000000e+00 : f32
    %7 = vector.broadcast %cst_6 : f32 to vector<32x128xf32>
    %8 = arith.maximumf %6, %7 : vector<32x128xf32>
    %9 = arith.truncf %8 : vector<32x128xf32> to vector<32x128xbf16>
    %c0_7 = arith.constant 0 : index
    %c0_8 = arith.constant 0 : index
    %10 = vector.load %arg6[%c0_7, %c0_8] : memref<128x128xbf16, #tpu.memory_space<vmem>>, vector<128x128xbf16>
    %cst_9 = arith.constant dense<0.000000e+00> : vector<32x128xf32>
    %11 = tpu.matmul %9, %10, %cst_9 {dimension_numbers = #tpu.dot_dimension_numbers<[1], [0], [0], [1], [0, 0, 1, 1], [], []>} : vector<32x128xbf16>, vector<128x128xbf16>, vector<32x128xf32> -> vector<32x128xf32>
    %c0_10 = arith.constant 0 : index
    %c0_11 = arith.constant 0 : index
    %12 = vector.load %arg7[%c0_10, %c0_11] : memref<1x128xf32, #tpu.memory_space<vmem>>, vector<1x128xf32>
    %13 = vector.broadcast %12 : vector<1x128xf32> to vector<32x128xf32>
    %14 = arith.addf %11, %13 : vector<32x128xf32>
    %15 = vector.shape_cast %14 : vector<32x128xf32> to vector<4x8x128xf32>
    %c0_12 = arith.constant 0 : index
    %c0_13 = arith.constant 0 : index
    %c0_14 = arith.constant 0 : index
    %16 = vector.load %arg3[%c0_12, %c0_13, %c0_14] : memref<4x8x1xf32, #tpu.memory_space<vmem>>, vector<4x8x1xf32>
    %17 = vector.broadcast %16 : vector<4x8x1xf32> to vector<4x8x128xf32>
    %18 = arith.mulf %17, %15 : vector<4x8x128xf32>
    %cst_15 = arith.constant dense<0xFF800000> : vector<8x128xf32>
    %19 = vector.multi_reduction <maximumf>, %18, %cst_15 [0] : vector<4x8x128xf32> to vector<8x128xf32>
    %20 = vector.shape_cast %19 : vector<8x128xf32> to vector<1x8x128xf32>
    %21 = vector.broadcast %20 : vector<1x8x128xf32> to vector<4x8x128xf32>
    %22 = arith.subf %18, %21 : vector<4x8x128xf32>
    %23 = math.exp %22 : vector<4x8x128xf32>
    %c0_16 = arith.constant 0 : index
    %c0_17 = arith.constant 0 : index
    %c0_18 = arith.constant 0 : index
    %24 = vector.load %arg2[%c0_16, %c0_17, %c0_18] : memref<4x8x128xf32, #tpu.memory_space<vmem>>, vector<4x8x128xf32>
    %25 = arith.mulf %23, %24 : vector<4x8x128xf32>
    %cst_19 = arith.constant dense<0.000000e+00> : vector<8x128xf32>
    %26 = vector.multi_reduction <add>, %25, %cst_19 [0] : vector<4x8x128xf32> to vector<8x128xf32>
    %cst_20 = arith.constant dense<0.000000e+00> : vector<8x128xf32>
    %27 = vector.multi_reduction <add>, %23, %cst_20 [0] : vector<4x8x128xf32> to vector<8x128xf32>
    %28 = tpu.reciprocal %27 {approx = true} : vector<8x128xf32> -> vector<8x128xf32>
    %29 = arith.mulf %26, %28 : vector<8x128xf32>
    %c0_21 = arith.constant 0 : index
    %c0_22 = arith.constant 0 : index
    %30 = vector.load %arg8[%c0_21, %c0_22] : memref<8x128xf32, #tpu.memory_space<vmem>>, vector<8x128xf32>
    tpu.vector_store %arg8[%c0_21, %c0_22], %29 {strides = array<i32>} : memref<8x128xf32, #tpu.memory_space<vmem>>, vector<8x128xf32>,
    return
  }
  func.func @transform_0(%arg0: i32) -> (i32, i32, i32) {
    %c0_i32 = arith.constant 0 : i32
    %c0_i32_0 = arith.constant 0 : i32
    %c0_i32_1 = arith.constant 0 : i32
    return %c0_i32, %arg0, %c0_i32_0 : i32, i32, i32
  }
  func.func @transform_1(%arg0: i32) -> (i32, i32, i32) {
    %c0_i32 = arith.constant 0 : i32
    %c0_i32_0 = arith.constant 0 : i32
    %c0_i32_1 = arith.constant 0 : i32
    return %c0_i32, %arg0, %c0_i32_0 : i32, i32, i32
  }
  func.func @transform_2(%arg0: i32) -> (i32, i32, i32) {
    %c0_i32 = arith.constant 0 : i32
    %c0_i32_0 = arith.constant 0 : i32
    %c0_i32_1 = arith.constant 0 : i32
    return %c0_i32, %arg0, %c0_i32_0 : i32, i32, i32
  }
  func.func @transform_3(%arg0: i32) -> (i32, i32) {
    %c0_i32 = arith.constant 0 : i32
    %c0_i32_0 = arith.constant 0 : i32
    %c0_i32_1 = arith.constant 0 : i32
    return %c0_i32, %c0_i32_0 : i32, i32
  }
  func.func @transform_4(%arg0: i32) -> (i32, i32) {
    %c0_i32 = arith.constant 0 : i32
    %c0_i32_0 = arith.constant 0 : i32
    %c0_i32_1 = arith.constant 0 : i32
    return %c0_i32, %c0_i32_0 : i32, i32
  }
  func.func @transform_5(%arg0: i32) -> (i32, i32) {
    %c0_i32 = arith.constant 0 : i32
    %c0_i32_0 = arith.constant 0 : i32
    %c0_i32_1 = arith.constant 0 : i32
    return %c0_i32, %c0_i32_0 : i32, i32
  }
  func.func @transform_6(%arg0: i32) -> (i32, i32) {
    %c0_i32 = arith.constant 0 : i32
    %c0_i32_0 = arith.constant 0 : i32
    %c0_i32_1 = arith.constant 0 : i32
    return %c0_i32, %c0_i32_0 : i32, i32
  }
  func.func @transform_7(%arg0: i32) -> (i32, i32) {
    %c0_i32 = arith.constant 0 : i32
    %c0_i32_0 = arith.constant 0 : i32
    return %arg0, %c0_i32 : i32, i32
  }
}

</mosaic_0001>

<llo_original>
// kernel: tpu_custom_call.1
$region0: #{tpu_custom_call.1}
  #allocation0 [shape = 'u32[]', space=smem, size = 0x4, offset = 0x4, fixed_abs, tag = 'smem constant byte address 0x4 - core index']
  #allocation1 [shape = 'u32[144,128]{1,0:T(1,128)}', space=vmem, size = 0x12000, scoped, tag = 'internal scratch']
  %s0 = inlined_call_operand.hbm [shape: bf16[4,8,128], index: 0, kind: input, shape index: {}]
  %s1 = inlined_call_operand.vmem [shape: f32[4,8,128], index: 1, kind: input, shape index: {}]
  %s2 = inlined_call_operand.vmem [shape: f32[4,8,1], index: 2, kind: input, shape index: {}]
  %s3 = inlined_call_operand.hbm [shape: bf16[128,128], index: 3, kind: input, shape index: {}]
  %s4 = inlined_call_operand.vmem [shape: f32[1,128], index: 4, kind: input, shape index: {}]
  %s5 = inlined_call_operand.hbm [shape: bf16[128,128], index: 5, kind: input, shape index: {}]
  %s6 = inlined_call_operand.vmem [shape: f32[1,128], index: 6, kind: input, shape index: {}]
  %s7 = inlined_call_operand.hbm [shape: f32[8,128], index: 7, kind: output, shape index: {}]
  %s8 = sld [smem:[#allocation0]]
  $region50: #{tpu_custom_call.1} parent=0
    _
  %s10 = ssub.s32 1, %s8
  %s11 = scalar_select 0, %s10, %s8
  $region1: #{tpu_custom_call.1} parent=0
    #allocation2 [shape = 'u8[8192]{0}', space=vmem, size = 0x2000, scoped, tag = 'input window, operand 0, single buffered']
    #allocation3 [shape = 's32[1]{0}', space=sflag, size = 0x4, scoped, tag = 'scoped memory for tpu_custom_call.1']
    #allocation4 [shape = 's32[1]{0}', space=sflag, size = 0x4, scoped, tag = 'scoped memory for tpu_custom_call.1']
    #allocation5 [shape = 'u8[32768]{0}', space=vmem, size = 0x8000, scoped, tag = 'input window, operand 3, single buffered']
    #allocation6 [shape = 's32[1]{0}', space=sflag, size = 0x4, scoped, tag = 'scoped memory for tpu_custom_call.1']
    #allocation7 [shape = 'u8[32768]{0}', space=vmem, size = 0x8000, scoped, tag = 'input window, operand 5, single buffered']
    #allocation8 [shape = 'u8[4096]{0}', space=vmem, size = 0x1000, scoped, tag = 'output window, operand 0, single buffered']
    %12 = vsyncpa [#allocation3], 0
    %13 = vsyncpa [#allocation6], 0
    %14 = vsyncpa [#allocation4], 0
    // Predicated region
    $region2: #{tpu_custom_call.1} parent=1 // pred_check
      _
    $region3: #{tpu_custom_call.1} parent=1 // pred_check_branch
      %16 = sbr.rel (0) target = $region5
    $region4: #{tpu_custom_call.1} parent=1 // pred_region
      %s18 = ssub.s32 256, 256
      %19 = vsyncadd [#allocation3], %s18
      %s20 = sshll.u32 [#allocation2], 4
      %s21 = int_to_ptr.vmem [resolvable:$true] %s20
      %26 = dma.hbm_to_vmem [thread:$0]  %s0, 256, %s21, [#allocation3], 64, 64, 4
    $region5: #{tpu_custom_call.1} parent=1 // pred_fallthru
      _
    // Predicated region
    $region6: #{tpu_custom_call.1} parent=1 // pred_check
      _
    $region7: #{tpu_custom_call.1} parent=1 // pred_check_branch
      %28 = sbr.rel (0) target = $region9
    $region8: #{tpu_custom_call.1} parent=1 // pred_region
      _
    $region9: #{tpu_custom_call.1} parent=1 // pred_fallthru
      _
    // Predicated region
    $region10: #{tpu_custom_call.1} parent=1 // pred_check
      _
    $region11: #{tpu_custom_call.1} parent=1 // pred_check_branch
      %30 = sbr.rel (0) target = $region13
    $region12: #{tpu_custom_call.1} parent=1 // pred_region
      _
    $region13: #{tpu_custom_call.1} parent=1 // pred_fallthru
      _
    // Predicated region
    $region14: #{tpu_custom_call.1} parent=1 // pred_check
      _
    $region15: #{tpu_custom_call.1} parent=1 // pred_check_branch
      %32 = sbr.rel (0) target = $region17
    $region16: #{tpu_custom_call.1} parent=1 // pred_region
      %s34 = ssub.s32 1024, 1024
      %35 = vsyncadd [#allocation6], %s34
      %s36 = sshll.u32 [#allocation5], 4
      %s37 = int_to_ptr.vmem [resolvable:$true] %s36
      %42 = dma.hbm_to_vmem [thread:$0]  %s3, 1024, %s37, [#allocation6], 64, 64, 4
    $region17: #{tpu_custom_call.1} parent=1 // pred_fallthru
      _
    // Predicated region
    $region18: #{tpu_custom_call.1} parent=1 // pred_check
      _
    $region19: #{tpu_custom_call.1} parent=1 // pred_check_branch
      %44 = sbr.rel (0) target = $region21
    $region20: #{tpu_custom_call.1} parent=1 // pred_region
      _
    $region21: #{tpu_custom_call.1} parent=1 // pred_fallthru
      _
    // Predicated region
    $region22: #{tpu_custom_call.1} parent=1 // pred_check
      _
    $region23: #{tpu_custom_call.1} parent=1 // pred_check_branch
      %46 = sbr.rel (0) target = $region25
    $region24: #{tpu_custom_call.1} parent=1 // pred_region
      %s48 = ssub.s32 1024, 1024
      %49 = vsyncadd [#allocation6], %s48
      %s50 = sshll.u32 [#allocation7], 4
      %s51 = int_to_ptr.vmem [resolvable:$true] %s50
      %56 = dma.hbm_to_vmem [thread:$0]  %s5, 1024, %s51, [#allocation6], 64, 64, 4
    $region25: #{tpu_custom_call.1} parent=1 // pred_fallthru
      _
    // Predicated region
    $region26: #{tpu_custom_call.1} parent=1 // pred_check
      _
    $region27: #{tpu_custom_call.1} parent=1 // pred_check_branch
      %58 = sbr.rel (0) target = $region29
    $region28: #{tpu_custom_call.1} parent=1 // pred_region
      _
    $region29: #{tpu_custom_call.1} parent=1 // pred_fallthru
      _
    // Predicated region
    $region30: #{tpu_custom_call.1} parent=1 // pred_check
      _
    $region31: #{tpu_custom_call.1} parent=1 // pred_check_branch
      %60 = sbr.rel (0) target = $region33
    $region32: #{tpu_custom_call.1} parent=1 // pred_region
      %61 = dma.done [#allocation3], 256
    $region33: #{tpu_custom_call.1} parent=1 // pred_fallthru
      _
    // Predicated region
    $region34: #{tpu_custom_call.1} parent=1 // pred_check
      _
    $region35: #{tpu_custom_call.1} parent=1 // pred_check_branch
      %63 = sbr.rel (0) target = $region37
    $region36: #{tpu_custom_call.1} parent=1 // pred_region
      %64 = dma.done [#allocation6], 1024
    $region37: #{tpu_custom_call.1} parent=1 // pred_fallthru
      _
    // Predicated region
    $region38: #{tpu_custom_call.1} parent=1 // pred_check
      _
    $region39: #{tpu_custom_call.1} parent=1 // pred_check_branch
      %66 = sbr.rel (0) target = $region41
    $region40: #{tpu_custom_call.1} parent=1 // pred_region
      %67 = dma.done [#allocation6], 1024
    $region41: #{tpu_custom_call.1} parent=1 // pred_fallthru
      _
    %v69 = vld [vmem:[#allocation2] sm:$0xf]
    %v70 = vld [vmem:[#allocation2 + $0x4] sm:$0xf]
    %v71 = vld [vmem:[#allocation2 + $0x8] sm:$0xf]
    %v72 = vld [vmem:[#allocation2 + $0xc] sm:$0xf]
    %v73 = vld [vmem:[#allocation5] sm:$0xf]
    %v74 = vld [vmem:[#allocation5 + $0x4] sm:$0xf]
    %v75 = vld [vmem:[#allocation5 + $0x8] sm:$0xf]
    %v76 = vld [vmem:[#allocation5 + $0xc] sm:$0xf]
    %v77 = vld [vmem:[#allocation5 + $0x10] sm:$0xf]
    %v78 = vld [vmem:[#allocation5 + $0x14] sm:$0xf]
    %v79 = vld [vmem:[#allocation5 + $0x18] sm:$0xf]
    %v80 = vld [vmem:[#allocation5 + $0x1c] sm:$0xf]
    %v81 = vld [vmem:[#allocation5 + $0x20] sm:$0xf]
    %v82 = vld [vmem:[#allocation5 + $0x24] sm:$0xf]
    %v83 = vld [vmem:[#allocation5 + $0x28] sm:$0xf]
    %v84 = vld [vmem:[#allocation5 + $0x2c] sm:$0xf]
    %v85 = vld [vmem:[#allocation5 + $0x30] sm:$0xf]
    %v86 = vld [vmem:[#allocation5 + $0x34] sm:$0xf]
    %v87 = vld [vmem:[#allocation5 + $0x38] sm:$0xf]
    %v88 = vld [vmem:[#allocation5 + $0x3c] sm:$0xf]
    %v89 = vld [vmem:[%s4] sm:$0x1]
    %v91 = vlaneseq
    %v92 = vshrl.u32 %v91, 7
    %v93 = vsub.s32 0, %v92
    %v94 = vrot.slane %v89, %v93
    %v100 = vunpack.c.l.b16 %v69
    %v101 = vunpack.c.l.b16 %v70
    %v102 = vunpack.c.l.b16 %v71
    %v103 = vunpack.c.l.b16 %v72
    %v104 = vpack.c.b16 %v101, %v100
    %v105 = vpack.c.b16 %v103, %v102
    %v124 = vunpack.c.l.b16 %v73
    %v125 = vunpack.c.l.b16 %v74
    %v126 = vunpack.c.l.b16 %v75
    %v127 = vunpack.c.l.b16 %v76
    %v128 = vunpack.c.l.b16 %v77
    %v129 = vunpack.c.l.b16 %v78
    %v130 = vunpack.c.l.b16 %v79
    %v131 = vunpack.c.l.b16 %v80
    %v132 = vunpack.c.l.b16 %v81
    %v133 = vunpack.c.l.b16 %v82
    %v134 = vunpack.c.l.b16 %v83
    %v135 = vunpack.c.l.b16 %v84
    %v136 = vunpack.c.l.b16 %v85
    %v137 = vunpack.c.l.b16 %v86
    %v138 = vunpack.c.l.b16 %v87
    %v139 = vunpack.c.l.b16 %v88
    %v140 = vpack.c.b16 %v125, %v124
    %v141 = vpack.c.b16 %v127, %v126
    %v142 = vpack.c.b16 %v129, %v128
    %v143 = vpack.c.b16 %v131, %v130
    %v144 = vpack.c.b16 %v133, %v132
    %v145 = vpack.c.b16 %v135, %v134
    %v146 = vpack.c.b16 %v137, %v136
    %v147 = vpack.c.b16 %v139, %v138
    %156 = vmatprep.subr.bf16.mxu0 0
    %157 = vmatpush1.bf16.msra.mxu0 %v140
    %158 = vmatprep.subr.bf16.mxu0 0
    %159 = vmatpush1.bf16.msra.mxu0 %v141
    %160 = vmatprep.subr.bf16.mxu0 0
    %161 = vmatpush1.bf16.msra.mxu0 %v142
    %162 = vmatprep.subr.bf16.mxu0 0
    %163 = vmatpush1.bf16.msra.mxu0 %v143
    %164 = vmatprep.subr.bf16.mxu0 0
    %165 = vmatpush1.bf16.msra.mxu0 %v144
    %166 = vmatprep.subr.bf16.mxu0 0
    %167 = vmatpush1.bf16.msra.mxu0 %v145
    %168 = vmatprep.subr.bf16.mxu0 0
    %169 = vmatpush1.bf16.msra.mxu0 %v146
    %170 = vmatprep.subr.bf16.mxu0 0
    %171 = vmatpush1.bf16.msra.mxu0 %v147
    %172 = vmatprep.subr.bf16.mxu0 0
    %173 = vmatpush1.bf16.msra.mxu0 0
    %174 = vmatprep.subr.bf16.mxu0 0
    %175 = vmatpush1.bf16.msra.mxu0 0
    %176 = vmatprep.subr.bf16.mxu0 0
    %177 = vmatpush1.bf16.msra.mxu0 0
    %178 = vmatprep.subr.bf16.mxu0 0
    %179 = vmatpush1.bf16.msra.mxu0 0
    %180 = vmatprep.subr.bf16.mxu0 0
    %181 = vmatpush1.bf16.msra.mxu0 0
    %182 = vmatprep.subr.bf16.mxu0 0
    %183 = vmatpush1.bf16.msra.mxu0 0
    %184 = vmatprep.subr.bf16.mxu0 0
    %185 = vmatpush1.bf16.msra.mxu0 0
    %186 = vmatprep.subr.bf16.mxu0 0
    %187 = vmatpush1.bf16.msra.mxu0 0
    %188 = vmatprep.mubr.bf16.mxu0 0
    %189 = vmatmul.mubr.bf16.gmra.mrb[0].mxu0 %v104
    %v190 = vpop.f32.mrb[0].mxu0
    %v191 = vadd.f32 %v94, %v190
    %v192 = vpop.f32.mrb[0].mxu0
    %v193 = vpop.f32.mrb[0].mxu0
    %v194 = vadd.f32 %v94, %v193
    %v195 = vpop.f32.mrb[0].mxu0
    %196 = vmatprep.mubr.bf16.mxu0 0
    %197 = vmatmul.mubr.bf16.gmra.mrb[0].mxu0 %v105
    %v198 = vpop.f32.mrb[0].mxu0
    %v199 = vadd.f32 %v94, %v198
    %v200 = vpop.f32.mrb[0].mxu0
    %v201 = vpop.f32.mrb[0].mxu0
    %v202 = vadd.f32 %v94, %v201
    %v203 = vpop.f32.mrb[0].mxu0
    %204 = vdwg.mxu0
    %v205 = vmax.f32 %v191, 0.0
    %v206 = vmax.f32 %v194, 0.0
    %v207 = vmax.f32 %v199, 0.0
    %v208 = vmax.f32 %v202, 0.0
    %v209 = vpack.c.bf16 %v206, %v205
    %v210 = vpack.c.bf16 %v208, %v207
    %v211 = vld [vmem:[#allocation7] sm:$0xf]
    %v212 = vld [vmem:[#allocation7 + $0x4] sm:$0xf]
    %v213 = vld [vmem:[#allocation7 + $0x8] sm:$0xf]
    %v214 = vld [vmem:[#allocation7 + $0xc] sm:$0xf]
    %v215 = vld [vmem:[#allocation7 + $0x10] sm:$0xf]
    %v216 = vld [vmem:[#allocation7 + $0x14] sm:$0xf]
    %v217 = vld [vmem:[#allocation7 + $0x18] sm:$0xf]
    %v218 = vld [vmem:[#allocation7 + $0x1c] sm:$0xf]
    %v219 = vld [vmem:[#allocation7 + $0x20] sm:$0xf]
    %v220 = vld [vmem:[#allocation7 + $0x24] sm:$0xf]
    %v221 = vld [vmem:[#allocation7 + $0x28] sm:$0xf]
    %v222 = vld [vmem:[#allocation7 + $0x2c] sm:$0xf]
    %v223 = vld [vmem:[#allocation7 + $0x30] sm:$0xf]
    %v224 = vld [vmem:[#allocation7 + $0x34] sm:$0xf]
    %v225 = vld [vmem:[#allocation7 + $0x38] sm:$0xf]
    %v226 = vld [vmem:[#allocation7 + $0x3c] sm:$0xf]
    %v227 = vld [vmem:[%s6] sm:$0x1]
    %v229 = vlaneseq
    %v230 = vshrl.u32 %v229, 7
    %v231 = vsub.s32 0, %v230
    %v232 = vrot.slane %v227, %v231
    %v250 = vunpack.c.l.b16 %v211
    %v251 = vunpack.c.l.b16 %v212
    %v252 = vunpack.c.l.b16 %v213
    %v253 = vunpack.c.l.b16 %v214
    %v254 = vunpack.c.l.b16 %v215
    %v255 = vunpack.c.l.b16 %v216
    %v256 = vunpack.c.l.b16 %v217
    %v257 = vunpack.c.l.b16 %v218
    %v258 = vunpack.c.l.b16 %v219
    %v259 = vunpack.c.l.b16 %v220
    %v260 = vunpack.c.l.b16 %v221
    %v261 = vunpack.c.l.b16 %v222
    %v262 = vunpack.c.l.b16 %v223
    %v263 = vunpack.c.l.b16 %v224
    %v264 = vunpack.c.l.b16 %v225
    %v265 = vunpack.c.l.b16 %v226
    %v266 = vpack.c.b16 %v251, %v250
    %v267 = vpack.c.b16 %v253, %v252
    %v268 = vpack.c.b16 %v255, %v254
    %v269 = vpack.c.b16 %v257, %v256
    %v270 = vpack.c.b16 %v259, %v258
    %v271 = vpack.c.b16 %v261, %v260
    %v272 = vpack.c.b16 %v263, %v262
    %v273 = vpack.c.b16 %v265, %v264
    %282 = vmatprep.subr.bf16.mxu0 0
    %283 = vmatpush1.bf16.msra.mxu0 %v266
    %284 = vmatprep.subr.bf16.mxu0 0
    %285 = vmatpush1.bf16.msra.mxu0 %v267
    %286 = vmatprep.subr.bf16.mxu0 0
    %287 = vmatpush1.bf16.msra.mxu0 %v268
    %288 = vmatprep.subr.bf16.mxu0 0
    %289 = vmatpush1.bf16.msra.mxu0 %v269
    %290 = vmatprep.subr.bf16.mxu0 0
    %291 = vmatpush1.bf16.msra.mxu0 %v270
    %292 = vmatprep.subr.bf16.mxu0 0
    %293 = vmatpush1.bf16.msra.mxu0 %v271
    %294 = vmatprep.subr.bf16.mxu0 0
    %295 = vmatpush1.bf16.msra.mxu0 %v272
    %296 = vmatprep.subr.bf16.mxu0 0
    %297 = vmatpush1.bf16.msra.mxu0 %v273
    %298 = vmatprep.subr.bf16.mxu0 0
    %299 = vmatpush1.bf16.msra.mxu0 0
    %300 = vmatprep.subr.bf16.mxu0 0
    %301 = vmatpush1.bf16.msra.mxu0 0
    %302 = vmatprep.subr.bf16.mxu0 0
    %303 = vmatpush1.bf16.msra.mxu0 0
    %304 = vmatprep.subr.bf16.mxu0 0
    %305 = vmatpush1.bf16.msra.mxu0 0
    %306 = vmatprep.subr.bf16.mxu0 0
    %307 = vmatpush1.bf16.msra.mxu0 0
    %308 = vmatprep.subr.bf16.mxu0 0
    %309 = vmatpush1.bf16.msra.mxu0 0
    %310 = vmatprep.subr.bf16.mxu0 0
    %311 = vmatpush1.bf16.msra.mxu0 0
    %312 = vmatprep.subr.bf16.mxu0 0
    %313 = vmatpush1.bf16.msra.mxu0 0
    %314 = vmatprep.mubr.bf16.mxu0 0
    %315 = vmatmul.mubr.bf16.gmra.mrb[0].mxu0 %v209
    %v316 = vpop.f32.mrb[0].mxu0
    %v317 = vadd.f32 %v232, %v316
    %v318 = vpop.f32.mrb[0].mxu0
    %v319 = vpop.f32.mrb[0].mxu0
    %v320 = vadd.f32 %v232, %v319
    %v321 = vpop.f32.mrb[0].mxu0
    %322 = vmatprep.mubr.bf16.mxu0 0
    %323 = vmatmul.mubr.bf16.gmra.mrb[0].mxu0 %v210
    %v324 = vpop.f32.mrb[0].mxu0
    %v325 = vadd.f32 %v232, %v324
    %v326 = vpop.f32.mrb[0].mxu0
    %v327 = vpop.f32.mrb[0].mxu0
    %v328 = vadd.f32 %v232, %v327
    %v329 = vpop.f32.mrb[0].mxu0
    %330 = vdwg.mxu0
    %v331 = vld [vmem:[%s2] sm:$0xff]
    %v332 = vld [vmem:[%s2 + $0x8] sm:$0xff]
    %v333 = vld [vmem:[%s2 + $0x10] sm:$0xff]
    %v334 = vld [vmem:[%s2 + $0x18] sm:$0xff]
    %336 = vset.pattern.permute.xlu0 0
    %337 = vperm.xlu0 %336, %v331
    %v338 = vpop.permute.xlu0 %337
    %341 = vset.pattern.permute.xlu0 0
    %342 = vperm.xlu0 %341, %v332
    %v343 = vpop.permute.xlu0 %342
    %346 = vset.pattern.permute.xlu0 0
    %347 = vperm.xlu0 %346, %v333
    %v348 = vpop.permute.xlu0 %347
    %351 = vset.pattern.permute.xlu0 0
    %352 = vperm.xlu0 %351, %v334
    %v353 = vpop.permute.xlu0 %352
    %v355 = vmul.f32 %v338, %v317
    %v356 = vmul.f32 %v343, %v320
    %v357 = vmul.f32 %v348, %v325
    %v358 = vmul.f32 %v353, %v328
    %v359 = vmax.f32 %v355, %v356
    %v360 = vmax.f32 %v357, %v358
    %v361 = vmax.f32 %v359, %v360
    %v362 = vsub.f32 %v355, %v361
    %v363 = vsub.f32 %v356, %v361
    %v364 = vsub.f32 %v357, %v361
    %v365 = vsub.f32 %v358, %v361
    %v366 = vmul.f32 %v362, 1.442695
    %v367 = vpow.pop %v366
    %v368 = vmul.f32 %v363, 1.442695
    %v369 = vpow.pop %v368
    %v370 = vmul.f32 %v364, 1.442695
    %v371 = vpow.pop %v370
    %v372 = vmul.f32 %v365, 1.442695
    %v373 = vpow.pop %v372
    %v374 = vld [vmem:[%s1] sm:$0xff]
    %v375 = vld [vmem:[%s1 + $0x8] sm:$0xff]
    %v376 = vld [vmem:[%s1 + $0x10] sm:$0xff]
    %v377 = vld [vmem:[%s1 + $0x18] sm:$0xff]
    %v378 = vmul.f32 %v367, %v374
    %v379 = vmul.f32 %v369, %v375
    %v380 = vmul.f32 %v371, %v376
    %v381 = vmul.f32 %v373, %v377
    %v382 = vadd.f32 %v378, %v379
    %v383 = vadd.f32 %v382, %v380
    %v384 = vadd.f32 %v383, %v381
    %v385 = vadd.f32 %v367, %v369
    %v386 = vadd.f32 %v385, %v371
    %v387 = vadd.f32 %v386, %v373
    %v388 = vrcp.pop %v387
    %v389 = vmul.f32 %v384, %v388
    %390 = vst [vmem:[#allocation8] sm:$0xff] %v389
    // Predicated region
    $region42: #{tpu_custom_call.1} parent=1 // pred_check
      _
    $region43: #{tpu_custom_call.1} parent=1 // pred_check_branch
      %392 = sbr.rel (0) target = $region45
    $region44: #{tpu_custom_call.1} parent=1 // pred_region
      %s394 = ssub.s32 128, 128
      %395 = vsyncadd [#allocation4], %s394
      %s397 = sshll.u32 [#allocation8], 4
      %s398 = int_to_ptr.vmem [resolvable:$true] %s397
      %400 = dma.vmem_to_hbm [thread:$0]  %s398, 128, %s7, [#allocation4]
    $region45: #{tpu_custom_call.1} parent=1 // pred_fallthru
      _
    // Predicated region
    $region46: #{tpu_custom_call.1} parent=1 // pred_check
      _
    $region47: #{tpu_custom_call.1} parent=1 // pred_check_branch
      %402 = sbr.rel (0) target = $region49
    $region48: #{tpu_custom_call.1} parent=1 // pred_region
      %403 = dma.done [#allocation4], 128
    $region49: #{tpu_custom_call.1} parent=1 // pred_fallthru
      _
    %404 = vsyncpa [#allocation3], 1
    %405 = vsyncpa [#allocation6], 1
    %406 = vsyncpa [#allocation4], 1

</llo_original>
